<compile_context>
chip_gen: v5e
topology: v5e:2x2
jax: 0.10.0
libtpu: 0.0.40
codegen_flags: <defaults>
</compile_context>

<pallas_src>
import jax
import jax.numpy as jnp
from jax.experimental import pallas as pl
from jax.experimental.pallas import tpu as pltpu


def _rubi_kernel(w_ref, main_ref, biased_ref, labels_ref,
                 comb_ref, main_loss_ref, biased_loss_ref):
    # w_ref      : SMEM (1,)    f32  -- biased_loss_weighting
    # main_ref   : VMEM (TB, C) caller dtype (f32/bf16)
    # biased_ref : VMEM (TB, C) caller dtype
    # labels_ref : VMEM (TB, 1) i32
    main = main_ref[...].astype(jnp.float32)
    biased = biased_ref[...].astype(jnp.float32)
    labels = labels_ref[...]                       # (TB, 1) int32
    w = w_ref[0]                                   # scalar weight

    # --- Pick label logits once; onehot retires before the exp-heavy phase. ---
    cls_idx = jax.lax.broadcasted_iota(jnp.int32, main.shape, 1)   # (TB, C)
    onehot = cls_idx == labels                                     # (TB, C) bool
    picked_main = jnp.sum(jnp.where(onehot, main, 0.0), axis=-1, keepdims=True)
    picked_biased = jnp.sum(jnp.where(onehot, biased, 0.0), axis=-1, keepdims=True)
    # combined[i, label] derived algebraically -> saves a 3rd select + reduce.
    picked_comb = picked_main * (jax.nn.sigmoid(picked_biased) * w)

    # --- Elementwise hot path: sigmoid mask + weighted modulation (VPU/EUP). ---
    combined = main * (jax.nn.sigmoid(biased) * w)

    def lse(x):
        # Numerically stable logsumexp over the class (lane) axis -> (TB, 1).
        m = jnp.max(x, axis=-1, keepdims=True)
        return m + jnp.log(jnp.sum(jnp.exp(x - m), axis=-1, keepdims=True))

    comb_ref[...] = lse(combined) - picked_comb
    main_loss_ref[...] = lse(main) - picked_main
    biased_loss_ref[...] = lse(biased) - picked_biased


def _choose_block_b(B, C, itemsize):
    # Cap one logit tile at ~2 MiB: 2 inputs x 2 pipeline buffers <= 8 MiB of
    # DMA buffers, leaving headroom for f32 intermediates inside a 32 MiB
    # scoped-VMEM budget (safe on v5e / v6e / v7x alike).
    per_tile_budget = 2 * 1024 * 1024
    tb = per_tile_budget // max(1, C * itemsize)
    tb = max(8, min(1024, (tb // 8) * 8))
    b_pad8 = ((B + 7) // 8) * 8
    return min(tb, b_pad8)


def rubi_criterion(main_logits, biased_logits, labels, biased_loss_weighting=1.0,
                   block_b=None):
    assert main_logits.shape == biased_logits.shape, (
        f'Main and biased class logits are not the same shape. '
        f'{main_logits.shape} and {biased_logits.shape}')
    B, C = main_logits.shape
    itemsize = jnp.dtype(main_logits.dtype).itemsize

    if block_b is None:
        tb = _choose_block_b(B, C, itemsize)
    else:
        tb = max(8, (block_b // 8) * 8)
        tb = min(tb, ((B + 7) // 8) * 8)
    nb = (B + tb - 1) // tb
    b_pad = nb * tb

    w = jnp.asarray([biased_loss_weighting], dtype=jnp.float32)
    labels2d = labels.astype(jnp.int32).reshape(B, 1)
    if b_pad != B:
        pad = b_pad - B
        main_logits = jnp.pad(main_logits, ((0, pad), (0, 0)))
        biased_logits = jnp.pad(biased_logits, ((0, pad), (0, 0)))
        labels2d = jnp.pad(labels2d, ((0, pad), (0, 0)))

    comb, main_l, biased_l = pl.pallas_call(
        _rubi_kernel,
        grid=(nb,),
        out_shape=[jax.ShapeDtypeStruct((b_pad, 1), jnp.float32)] * 3,
        in_specs=[
            pl.BlockSpec(memory_space=pltpu.MemorySpace.SMEM),    # weight scalar
            pl.BlockSpec((tb, C), lambda i: (i, 0)),              # main_logits
            pl.BlockSpec((tb, C), lambda i: (i, 0)),              # biased_logits
            pl.BlockSpec((tb, 1), lambda i: (i, 0)),              # labels
        ],
        out_specs=[pl.BlockSpec((tb, 1), lambda i: (i, 0))] * 3,
        compiler_params=pltpu.CompilerParams(
            dimension_semantics=("parallel",),
            vmem_limit_bytes=32 * 1024 * 1024),
    )(w, main_logits, biased_logits, labels2d)

    return {
        'combined_loss': comb.reshape(b_pad)[:B],
        'main_loss': main_l.reshape(b_pad)[:B],
        'biased_loss': biased_l.reshape(b_pad)[:B],
    }


if __name__ == "__main__":
    # Pure-JAX reference (mirrors torch.nn.CrossEntropyLoss(reduction='none')).
    def ce_ref(logits, lbls):
        logp = jax.nn.log_softmax(logits.astype(jnp.float32), axis=-1)
        return -jnp.take_along_axis(logp, lbls[:, None], axis=-1)[:, 0]

    def check(main_logits, biased_logits, labels, weighting, out, atol):
        mf = main_logits.astype(jnp.float32)
        bf = biased_logits.astype(jnp.float32)
        combined = mf * (jax.nn.sigmoid(bf) * weighting)
        assert jnp.allclose(out['combined_loss'], ce_ref(combined, labels), atol=atol)
        assert jnp.allclose(out['main_loss'], ce_ref(mf, labels), atol=atol)
        assert jnp.allclose(out['biased_loss'], ce_ref(bf, labels), atol=atol)

    # Case 1: small f32 problem, single tile.
    B, C = 8, 32
    k1, k2, k3 = jax.random.split(jax.random.PRNGKey(0), 3)
    main_logits = jax.random.normal(k1, (B, C), dtype=jnp.float32)
    biased_logits = jax.random.normal(k2, (B, C), dtype=jnp.float32)
    labels = jax.random.randint(k3, (B,), 0, C, dtype=jnp.int32)
    out = rubi_criterion(main_logits, biased_logits, labels, 1.0)
    jax.block_until_ready(out)
    check(main_logits, biased_logits, labels, 1.0, out, 1e-5)

    # Case 2: bf16 inputs, batch not a multiple of the tile, forced multi-tile
    # grid -> exercises the pipelined / padded path and the bf16 upcast.
    B2, C2 = 40, 128
    k4, k5, k6 = jax.random.split(jax.random.PRNGKey(1), 3)
    main2 = jax.random.normal(k4, (B2, C2), dtype=jnp.bfloat16)
    biased2 = jax.random.normal(k5, (B2, C2), dtype=jnp.bfloat16)
    labels2 = jax.random.randint(k6, (B2,), 0, C2, dtype=jnp.int32)
    out2 = rubi_criterion(main2, biased2, labels2, 0.5, block_b=16)
    jax.block_until_ready(out2)
    check(main2, biased2, labels2, 0.5, out2, 1e-4)

    print("KERNEL_OK")
</pallas_src>

<mosaic_0001>
module attributes {stable_mosaic.version = 11 : i64} {
  func.func @_rubi_kernel(%arg0: i32, %arg1: memref<1xf32, #tpu.memory_space<smem>>, %arg2: memref<8x32xf32, #tpu.memory_space<vmem>>, %arg3: memref<8x32xf32, #tpu.memory_space<vmem>>, %arg4: memref<8x1xi32, #tpu.memory_space<vmem>>, %arg5: memref<8x1xf32, #tpu.memory_space<vmem>>, %arg6: memref<8x1xf32, #tpu.memory_space<vmem>>, %arg7: memref<8x1xf32, #tpu.memory_space<vmem>>) attributes {dimension_semantics = [#tpu.dimension_semantics<parallel>], iteration_bounds = array<i64: 1>, scalar_prefetch = 0 : i64, scratch_operands = 0 : i64, tpu.core_type = #tpu.core_type<tc>, window_params = [{transform_indices = @transform_0, window_bounds = array<i64: 1>}, {transform_indices = @transform_1, window_bounds = array<i64: 8, 32>}, {transform_indices = @transform_2, window_bounds = array<i64: 8, 32>}, {transform_indices = @transform_3, window_bounds = array<i64: 8, 1>}, {transform_indices = @transform_4, window_bounds = array<i64: 8, 1>}, {transform_indices = @transform_5, window_bounds = array<i64: 8, 1>}, {transform_indices = @transform_6, window_bounds = array<i64: 8, 1>}]} {
    %c0 = arith.constant 0 : index
    %c0_0 = arith.constant 0 : index
    %0 = vector.load %arg2[%c0, %c0_0] : memref<8x32xf32, #tpu.memory_space<vmem>>, vector<8x32xf32>
    %c0_1 = arith.constant 0 : index
    %c0_2 = arith.constant 0 : index
    %1 = vector.load %arg3[%c0_1, %c0_2] : memref<8x32xf32, #tpu.memory_space<vmem>>, vector<8x32xf32>
    %c0_3 = arith.constant 0 : index
    %c0_4 = arith.constant 0 : index
    %2 = vector.load %arg4[%c0_3, %c0_4] : memref<8x1xi32, #tpu.memory_space<vmem>>, vector<8x1xi32>
    %c0_5 = arith.constant 0 : index
    %3 = memref.load %arg1[%c0_5] : memref<1xf32, #tpu.memory_space<smem>>
    %4 = tpu.iota {dimensions = array<i32: 1>} : vector<8x32xi32>
    %5 = vector.broadcast %2 : vector<8x1xi32> to vector<8x32xi32>
    %6 = arith.cmpi eq, %4, %5 : vector<8x32xi32>
    %cst = arith.constant 0.000000e+00 : f32
    %7 = vector.broadcast %cst : f32 to vector<8x32xf32>
    %8 = arith.select %6, %0, %7 : vector<8x32xi1>, vector<8x32xf32>
    %cst_6 = arith.constant dense<0.000000e+00> : vector<8xf32>
    %9 = vector.multi_reduction <add>, %8, %cst_6 [1] : vector<8x32xf32> to vector<8xf32>
    %10 = vector.shape_cast %9 : vector<8xf32> to vector<8x1xf32>
    %cst_7 = arith.constant 0.000000e+00 : f32
    %11 = vector.broadcast %cst_7 : f32 to vector<8x32xf32>
    %12 = arith.select %6, %1, %11 : vector<8x32xi1>, vector<8x32xf32>
    %cst_8 = arith.constant dense<0.000000e+00> : vector<8xf32>
    %13 = vector.multi_reduction <add>, %12, %cst_8 [1] : vector<8x32xf32> to vector<8xf32>
    %14 = vector.shape_cast %13 : vector<8xf32> to vector<8x1xf32>
    %15 = arith.negf %14 : vector<8x1xf32>
    %16 = math.exp %15 : vector<8x1xf32>
    %cst_9 = arith.constant 1.000000e+00 : f32
    %17 = vector.broadcast %cst_9 : f32 to vector<8x1xf32>
    %18 = arith.addf %17, %16 : vector<8x1xf32>
    %19 = arith.divf %17, %18 : vector<8x1xf32>
    %20 = vector.broadcast %3 : f32 to vector<8x1xf32>
    %21 = arith.mulf %19, %20 : vector<8x1xf32>
    %22 = arith.mulf %10, %21 : vector<8x1xf32>
    %23 = arith.negf %1 : vector<8x32xf32>
    %24 = math.exp %23 : vector<8x32xf32>
    %cst_10 = arith.constant 1.000000e+00 : f32
    %25 = vector.broadcast %cst_10 : f32 to vector<8x32xf32>
    %26 = arith.addf %25, %24 : vector<8x32xf32>
    %27 = arith.divf %25, %26 : vector<8x32xf32>
    %28 = vector.broadcast %3 : f32 to vector<8x32xf32>
    %29 = arith.mulf %27, %28 : vector<8x32xf32>
    %30 = arith.mulf %0, %29 : vector<8x32xf32>
    %cst_11 = arith.constant dense<0xFF800000> : vector<8xf32>
    %31 = vector.multi_reduction <maximumf>, %30, %cst_11 [1] : vector<8x32xf32> to vector<8xf32>
    %32 = vector.shape_cast %31 : vector<8xf32> to vector<8x1xf32>
    %33 = vector.broadcast %32 : vector<8x1xf32> to vector<8x32xf32>
    %34 = arith.subf %30, %33 : vector<8x32xf32>
    %35 = math.exp %34 : vector<8x32xf32>
    %cst_12 = arith.constant dense<0.000000e+00> : vector<8xf32>
    %36 = vector.multi_reduction <add>, %35, %cst_12 [1] : vector<8x32xf32> to vector<8xf32>
    %37 = vector.shape_cast %36 : vector<8xf32> to vector<8x1xf32>
    %38 = math.log %37 : vector<8x1xf32>
    %39 = arith.addf %32, %38 : vector<8x1xf32>
    %40 = arith.subf %39, %22 : vector<8x1xf32>
    %c0_13 = arith.constant 0 : index
    %c0_14 = arith.constant 0 : index
    %41 = vector.load %arg5[%c0_13, %c0_14] : memref<8x1xf32, #tpu.memory_space<vmem>>, vector<8x1xf32>
    tpu.vector_store %arg5[%c0_13, %c0_14], %40 {strides = array<i32>} : memref<8x1xf32, #tpu.memory_space<vmem>>, vector<8x1xf32>,
    %cst_15 = arith.constant dense<0xFF800000> : vector<8xf32>
    %42 = vector.multi_reduction <maximumf>, %0, %cst_15 [1] : vector<8x32xf32> to vector<8xf32>
    %43 = vector.shape_cast %42 : vector<8xf32> to vector<8x1xf32>
    %44 = vector.broadcast %43 : vector<8x1xf32> to vector<8x32xf32>
    %45 = arith.subf %0, %44 : vector<8x32xf32>
    %46 = math.exp %45 : vector<8x32xf32>
    %cst_16 = arith.constant dense<0.000000e+00> : vector<8xf32>
    %47 = vector.multi_reduction <add>, %46, %cst_16 [1] : vector<8x32xf32> to vector<8xf32>
    %48 = vector.shape_cast %47 : vector<8xf32> to vector<8x1xf32>
    %49 = math.log %48 : vector<8x1xf32>
    %50 = arith.addf %43, %49 : vector<8x1xf32>
    %51 = arith.subf %50, %10 : vector<8x1xf32>
    %c0_17 = arith.constant 0 : index
    %c0_18 = arith.constant 0 : index
    %52 = vector.load %arg6[%c0_17, %c0_18] : memref<8x1xf32, #tpu.memory_space<vmem>>, vector<8x1xf32>
    tpu.vector_store %arg6[%c0_17, %c0_18], %51 {strides = array<i32>} : memref<8x1xf32, #tpu.memory_space<vmem>>, vector<8x1xf32>,
    %cst_19 = arith.constant dense<0xFF800000> : vector<8xf32>
    %53 = vector.multi_reduction <maximumf>, %1, %cst_19 [1] : vector<8x32xf32> to vector<8xf32>
    %54 = vector.shape_cast %53 : vector<8xf32> to vector<8x1xf32>
    %55 = vector.broadcast %54 : vector<8x1xf32> to vector<8x32xf32>
    %56 = arith.subf %1, %55 : vector<8x32xf32>
    %57 = math.exp %56 : vector<8x32xf32>
    %cst_20 = arith.constant dense<0.000000e+00> : vector<8xf32>
    %58 = vector.multi_reduction <add>, %57, %cst_20 [1] : vector<8x32xf32> to vector<8xf32>
    %59 = vector.shape_cast %58 : vector<8xf32> to vector<8x1xf32>
    %60 = math.log %59 : vector<8x1xf32>
    %61 = arith.addf %54, %60 : vector<8x1xf32>
    %62 = arith.subf %61, %14 : vector<8x1xf32>
    %c0_21 = arith.constant 0 : index
    %c0_22 = arith.constant 0 : index
    %63 = vector.load %arg7[%c0_21, %c0_22] : memref<8x1xf32, #tpu.memory_space<vmem>>, vector<8x1xf32>
    tpu.vector_store %arg7[%c0_21, %c0_22], %62 {strides = array<i32>} : memref<8x1xf32, #tpu.memory_space<vmem>>, vector<8x1xf32>,
    return
  }
  func.func @transform_0(%arg0: i32) -> i32 {
    %c0_i32 = arith.constant 0 : i32
    %c0_i32_0 = arith.constant 0 : i32
    return %c0_i32 : i32
  }
  func.func @transform_1(%arg0: i32) -> (i32, i32) {
    %c0_i32 = arith.constant 0 : i32
    %c0_i32_0 = arith.constant 0 : i32
    return %arg0, %c0_i32 : i32, i32
  }
  func.func @transform_2(%arg0: i32) -> (i32, i32) {
    %c0_i32 = arith.constant 0 : i32
    %c0_i32_0 = arith.constant 0 : i32
    return %arg0, %c0_i32 : i32, i32
  }
  func.func @transform_3(%arg0: i32) -> (i32, i32) {
    %c0_i32 = arith.constant 0 : i32
    %c0_i32_0 = arith.constant 0 : i32
    return %arg0, %c0_i32 : i32, i32
  }
  func.func @transform_4(%arg0: i32) -> (i32, i32) {
    %c0_i32 = arith.constant 0 : i32
    %c0_i32_0 = arith.constant 0 : i32
    return %arg0, %c0_i32 : i32, i32
  }
  func.func @transform_5(%arg0: i32) -> (i32, i32) {
    %c0_i32 = arith.constant 0 : i32
    %c0_i32_0 = arith.constant 0 : i32
    return %arg0, %c0_i32 : i32, i32
  }
  func.func @transform_6(%arg0: i32) -> (i32, i32) {
    %c0_i32 = arith.constant 0 : i32
    %c0_i32_0 = arith.constant 0 : i32
    return %arg0, %c0_i32 : i32, i32
  }
}

</mosaic_0001>

<llo_original>
// kernel: tpu_custom_call.1
$region0: #{tpu_custom_call.1}
  #allocation0 [shape = 'u32[]', space=smem, size = 0x4, offset = 0x4, fixed_abs, tag = 'smem constant byte address 0x4 - core index']
  #allocation1 [shape = 'u32[72,128]{1,0:T(1,128)}', space=vmem, size = 0x9000, scoped, tag = 'internal scratch']
  #allocation2 [shape = 'f32[1]{0:T(128)S(6)}', space=smem, size = 0x200, scoped, tag = 'scoped memory for tpu_custom_call.1']
  %s0 = inlined_call_operand.<no memory space> [shape: f32[1], index: 0, kind: input, shape index: {}]
  %s1 = inlined_call_operand.vmem [shape: f32[8,32], index: 1, kind: input, shape index: {}]
  %s2 = inlined_call_operand.hbm [shape: f32[8,32], index: 2, kind: input, shape index: {}]
  %s3 = inlined_call_operand.vmem [shape: s32[8,1], index: 3, kind: input, shape index: {}]
  %s4 = inlined_call_operand.vmem [shape: f32[8,1], index: 4, kind: output, shape index: {0}]
  %s5 = inlined_call_operand.vmem [shape: f32[8,1], index: 5, kind: output, shape index: {1}]
  %s6 = inlined_call_operand.vmem [shape: f32[8,1], index: 6, kind: output, shape index: {2}]
  %7 = xla_tuple %s4, %s5, %s6
  %s8 = sld [smem:[#allocation0]]
  $region46: #{tpu_custom_call.1} parent=0
    _
  %s10 = ssub.s32 1, %s8
  %s11 = scalar_select 0, %s10, %s8
  %12 = sst [smem:[#allocation2]] %s0
  $region1: #{tpu_custom_call.1} parent=0
    #allocation3 [shape = 'u8[4096]{0}', space=vmem, size = 0x1000, scoped, tag = 'input window, operand 2, single buffered']
    #allocation4 [shape = 's32[1]{0}', space=sflag, size = 0x4, scoped, tag = 'scoped memory for tpu_custom_call.1']
    %13 = vsyncpa [#allocation4], 0
    // Predicated region
    $region2: #{tpu_custom_call.1} parent=1 // pred_check
      _
    $region3: #{tpu_custom_call.1} parent=1 // pred_check_branch
      %15 = sbr.rel (0) target = $region5
    $region4: #{tpu_custom_call.1} parent=1 // pred_region
      _
    $region5: #{tpu_custom_call.1} parent=1 // pred_fallthru
      _
    // Predicated region
    $region6: #{tpu_custom_call.1} parent=1 // pred_check
      _
    $region7: #{tpu_custom_call.1} parent=1 // pred_check_branch
      %17 = sbr.rel (0) target = $region9
    $region8: #{tpu_custom_call.1} parent=1 // pred_region
      _
    $region9: #{tpu_custom_call.1} parent=1 // pred_fallthru
      _
    // Predicated region
    $region10: #{tpu_custom_call.1} parent=1 // pred_check
      _
    $region11: #{tpu_custom_call.1} parent=1 // pred_check_branch
      %19 = sbr.rel (0) target = $region13
    $region12: #{tpu_custom_call.1} parent=1 // pred_region
      %21 = vsyncadd [#allocation4], 0
      %s23 = sshll.u32 %s2, 4
      %s24 = int_to_ptr.hbm [resolvable:$true] %s23
      %s25 = sshll.u32 [#allocation3], 4
      %s26 = int_to_ptr.vmem [resolvable:$true] %s25
      %28 = dma.hbm_to_vmem [thread:$0]  %s24, 128, %s26, [#allocation4]
    $region13: #{tpu_custom_call.1} parent=1 // pred_fallthru
      _
    // Predicated region
    $region14: #{tpu_custom_call.1} parent=1 // pred_check
      _
    $region15: #{tpu_custom_call.1} parent=1 // pred_check_branch
      %30 = sbr.rel (0) target = $region17
    $region16: #{tpu_custom_call.1} parent=1 // pred_region
      _
    $region17: #{tpu_custom_call.1} parent=1 // pred_fallthru
      _
    // Predicated region
    $region18: #{tpu_custom_call.1} parent=1 // pred_check
      _
    $region19: #{tpu_custom_call.1} parent=1 // pred_check_branch
      %32 = sbr.rel (0) target = $region21
    $region20: #{tpu_custom_call.1} parent=1 // pred_region
      %34 = dma.done [#allocation4], 128
    $region21: #{tpu_custom_call.1} parent=1 // pred_fallthru
      _
    %v35 = vld [vmem:[%s1] sm:$0xff]
    %v36 = vld [vmem:[#allocation3] sm:$0xff]
    %v37 = vld [vmem:[%s3] sm:$0xff]
    %s38 = sld [smem:[#allocation2]]
    %v39 = vlaneseq
    %v40 = vand.u32 %v39, 127
    %41 = vset.pattern.permute.xlu0 0
    %42 = vperm.xlu0 %41, %v37
    %v43 = vpop.permute.xlu0 %42
    %vm44 = vcmp.eq.s32.totalorder %v40, %v43
    %v45 = vsel %vm44, %v35, 0.0
    %vm46 = vcmask 261120
    %v47 = vsel %vm46, %v45, 0.0
    %48 = vadd.xlane.f32.xlu0 %v47
    %v49 = vpop.xlane.xlu0 %48
    %v50 = vsel %vm44, %v36, 0.0
    %v51 = vsel %vm46, %v50, 0.0
    %52 = vadd.xlane.f32.xlu0 %v51
    %v53 = vpop.xlane.xlu0 %52
    %v54 = vxor.u32 %v53, 2147483648
    %v55 = vmul.f32 %v54, 1.442695
    %v56 = vpow.pop %v55
    %v57 = vadd.f32 %v56, 1.0
    %v58 = vrcp.pop %v57
    %v59 = vmul.f32 %v57, %v58
    %v60 = vsub.f32 1.0, %v59
    %v61 = vmul.f32 %v58, %v60
    %v62 = vadd.f32 %v58, %v61
    %vm63 = vweird.f32 %v57
    %vm64 = vweird.f32 %v58
    %vm65 = vmor %vm63, %vm64
    %v66 = vsel %vm65, %v58, %v62
    %v67 = vand.u32 2147483647, %v57
    %vm68 = vcmp.eq.f32.partialorder %v67, 8.507059e+37
    %v69 = vand.u32 %v57, 2147483648
    %v70 = vor.u32 1.1754944e-38, %v69
    %v71 = vsel %vm68, %v70, %v66
    %v72 = vmul.f32 1.0, %v71
    %v73 = vstv %s38
    %v74 = vmul.f32 %v72, %v73
    %v75 = vmul.f32 %v49, %v74
    %v76 = vxor.u32 %v36, 2147483648
    %v77 = vmul.f32 %v76, 1.442695
    %v78 = vpow.pop %v77
    %v79 = vadd.f32 %v78, 1.0
    %v80 = vrcp.pop %v79
    %v81 = vmul.f32 %v79, %v80
    %v82 = vsub.f32 1.0, %v81
    %v83 = vmul.f32 %v80, %v82
    %v84 = vadd.f32 %v80, %v83
    %vm85 = vweird.f32 %v79
    %vm86 = vweird.f32 %v80
    %vm87 = vmor %vm85, %vm86
    %v88 = vsel %vm87, %v80, %v84
    %v89 = vand.u32 2147483647, %v79
    %vm90 = vcmp.eq.f32.partialorder %v89, 8.507059e+37
    %v91 = vand.u32 %v79, 2147483648
    %v92 = vor.u32 1.1754944e-38, %v91
    %v93 = vsel %vm90, %v92, %v88
    %v94 = vmul.f32 1.0, %v93
    %v95 = vmul.f32 %v94, %v73
    %v96 = vmul.f32 %v35, %v95
    %v97 = vsel %vm46, %v96, -inf
    %98 = vmax.xlane.f32.xlu0 %v97
    %v99 = vpop.xlane.xlu0 %98
    %v100 = vsub.f32 %v96, %v99
    %v101 = vmul.f32 %v100, 1.442695
    %v102 = vpow.pop %v101
    %v103 = vsel %vm46, %v102, 0.0
    %104 = vadd.xlane.f32.xlu0 %v103
    %v105 = vpop.xlane.xlu0 %104
    %v106 = vlog2.pop %v105
    %v107 = vmul.f32 %v106, 0.6931472
    %v108 = vadd.f32 %v99, %v107
    %v109 = vsub.f32 %v108, %v75
    %vm110 = vcmask 7168
    %111 = vst.msk [vmem:[%s4] sm:$0xff] %vm110, %v109
    %v112 = vsel %vm46, %v35, -inf
    %113 = vmax.xlane.f32.xlu0 %v112
    %v114 = vpop.xlane.xlu0 %113
    %v115 = vsub.f32 %v35, %v114
    %v116 = vmul.f32 %v115, 1.442695
    %v117 = vpow.pop %v116
    %v118 = vsel %vm46, %v117, 0.0
    %119 = vadd.xlane.f32.xlu0 %v118
    %v120 = vpop.xlane.xlu0 %119
    %v121 = vlog2.pop %v120
    %v122 = vmul.f32 %v121, 0.6931472
    %v123 = vadd.f32 %v114, %v122
    %v124 = vsub.f32 %v123, %v49
    %125 = vst.msk [vmem:[%s5] sm:$0xff] %vm110, %v124
    %v126 = vsel %vm46, %v36, -inf
    %127 = vmax.xlane.f32.xlu0 %v126
    %v128 = vpop.xlane.xlu0 %127
    %v129 = vsub.f32 %v36, %v128
    %v130 = vmul.f32 %v129, 1.442695
    %v131 = vpow.pop %v130
    %v132 = vsel %vm46, %v131, 0.0
    %133 = vadd.xlane.f32.xlu0 %v132
    %v134 = vpop.xlane.xlu0 %133
    %v135 = vlog2.pop %v134
    %v136 = vmul.f32 %v135, 0.6931472
    %v137 = vadd.f32 %v128, %v136
    %v138 = vsub.f32 %v137, %v53
    %139 = vst.msk [vmem:[%s6] sm:$0xff] %vm110, %v138
    // Predicated region
    $region22: #{tpu_custom_call.1} parent=1 // pred_check
      _
    $region23: #{tpu_custom_call.1} parent=1 // pred_check_branch
      %141 = sbr.rel (0) target = $region25
    $region24: #{tpu_custom_call.1} parent=1 // pred_region
      _
    $region25: #{tpu_custom_call.1} parent=1 // pred_fallthru
      _
    // Predicated region
    $region26: #{tpu_custom_call.1} parent=1 // pred_check
      _
    $region27: #{tpu_custom_call.1} parent=1 // pred_check_branch
      %143 = sbr.rel (0) target = $region29
    $region28: #{tpu_custom_call.1} parent=1 // pred_region
      _
    $region29: #{tpu_custom_call.1} parent=1 // pred_fallthru
      _
    // Predicated region
    $region30: #{tpu_custom_call.1} parent=1 // pred_check
      _
    $region31: #{tpu_custom_call.1} parent=1 // pred_check_branch
      %145 = sbr.rel (0) target = $region33
    $region32: #{tpu_custom_call.1} parent=1 // pred_region
      _
    $region33: #{tpu_custom_call.1} parent=1 // pred_fallthru
      _
    // Predicated region
    $region34: #{tpu_custom_call.1} parent=1 // pred_check
      _
    $region35: #{tpu_custom_call.1} parent=1 // pred_check_branch
      %147 = sbr.rel (0) target = $region37
    $region36: #{tpu_custom_call.1} parent=1 // pred_region
      _
    $region37: #{tpu_custom_call.1} parent=1 // pred_fallthru
      _
    // Predicated region
    $region38: #{tpu_custom_call.1} parent=1 // pred_check
      _
    $region39: #{tpu_custom_call.1} parent=1 // pred_check_branch
      %149 = sbr.rel (0) target = $region41
    $region40: #{tpu_custom_call.1} parent=1 // pred_region
      _
    $region41: #{tpu_custom_call.1} parent=1 // pred_fallthru
      _
    // Predicated region
    $region42: #{tpu_custom_call.1} parent=1 // pred_check
      _
    $region43: #{tpu_custom_call.1} parent=1 // pred_check_branch
      %151 = sbr.rel (0) target = $region45
    $region44: #{tpu_custom_call.1} parent=1 // pred_region
      _
    $region45: #{tpu_custom_call.1} parent=1 // pred_fallthru
      _
    %152 = vsyncpa [#allocation4], 1

</llo_original>
